<compile_context>
chip_gen: v6e
topology: v6e:2x2x1
jax: 0.10.0
libtpu: 0.0.40
codegen_flags: <defaults>
</compile_context>

<pallas_src>
import functools

import jax
import jax.numpy as jnp
from jax import lax
from jax.experimental import pallas as pl
from jax.experimental.pallas import tpu as pltpu

_LANE = 128
_CHUNK_ROWS = 256          # rows per in-kernel sub-chunk (f32 temporaries ~128 KiB each)
_BLOCK_BYTES = 1 << 20     # ~1 MiB per input per grid block


def _round_up(x, k):
    return ((x + k - 1) // k) * k


def _wbce_kernel(o_ref, t_ref, out_ref, *, weight, valid_rows, chunk_rows,
                 hard_labels, may_be_ragged):
    k = pl.program_id(0)
    tile_rows = o_ref.shape[0]
    tile_row0 = k * tile_rows

    # Output block index is constant across the grid -> VMEM-resident accumulator.
    @pl.when(k == 0)
    def _():
        out_ref[...] = jnp.zeros_like(out_ref)

    w = jnp.float32(weight)
    nchunks = tile_rows // chunk_rows

    def _reduce(x):
        # Fold (chunk_rows, 128) into (8, 128) with plain vreg adds (layout-free reshape).
        return jnp.sum(x.reshape(chunk_rows // 8, 8, _LANE), axis=0)

    # Fully unrolled sub-chunk loop: keeps the live f32 temporaries small while the DMA
    # block stays large (equivalent to lax.fori_loop(..., unroll=True); static slices).
    for ci in range(nchunks):
        r0 = ci * chunk_rows
        o = o_ref[r0:r0 + chunk_rows, :].astype(jnp.float32)
        t = t_ref[r0:r0 + chunk_rows, :].astype(jnp.float32)

        pos = t == 1.0
        wsel = jnp.where(pos, w, jnp.float32(1.0))
        if hard_labels:
            # Exact for {0,1} targets: single log per element.
            s = jnp.maximum(jnp.log(jnp.where(pos, o, 1.0 - o)), -100.0) * wsel
        else:
            # General (soft-label) path, factored: s = t*log_o + (1-t)*log_1mo.
            log_o = jnp.maximum(jnp.log(o), -100.0)
            log_1mo = jnp.maximum(jnp.log(1.0 - o), -100.0)
            s = (log_1mo + t * (log_o - log_1mo)) * wsel
        # Note: s == -weighted_ce; the negation is hoisted to the wrapper.

        if not may_be_ragged:
            out_ref[...] += _reduce(s)
        else:
            chunk_end = tile_row0 + r0 + chunk_rows

            @pl.when(chunk_end <= valid_rows)
            def _(s=s):
                out_ref[...] += _reduce(s)

            @pl.when(chunk_end > valid_rows)
            def _(s=s, r0=r0):
                # Ragged tail: zero rows past the true row count (garbage from the
                # partially out-of-bounds DMA block). where() selects, so NaN/Inf in
                # the masked rows cannot leak through.
                row = tile_row0 + r0 + lax.broadcasted_iota(jnp.int32, s.shape, 0)
                out_ref[...] += _reduce(jnp.where(row < valid_rows, s, 0.0))


def weighted_bce_loss(outputs, targets, weight=1.0, *, hard_labels=False):
    """Pallas implementation of WeightedBCELoss.forward.

    `hard_labels=True` enables the single-log fast path (exact when targets are {0,1}).
    """
    # outputs.reshape(targets.shape), then flatten to a lane-dense 2-D slab.
    outputs = jnp.reshape(outputs, targets.shape)
    if outputs.dtype not in (jnp.float32, jnp.bfloat16):
        outputs = outputs.astype(jnp.float32)
    if targets.dtype not in (jnp.float32, jnp.bfloat16):
        targets = targets.astype(jnp.float32)

    n = int(targets.size)
    o_flat = outputs.reshape(-1)
    t_flat = targets.reshape(-1)

    # Lane padding only when n % 128 != 0 (needed for the (m, 128) reshape). Padded with
    # (o=1, t=1) which contributes exactly 0; aligned sizes take the zero-copy path.
    m = _round_up(n, _LANE) // _LANE
    pad = m * _LANE - n
    if pad:
        o_flat = jnp.concatenate([o_flat, jnp.ones((pad,), o_flat.dtype)])
        t_flat = jnp.concatenate([t_flat, jnp.ones((pad,), t_flat.dtype)])
    o2 = o_flat.reshape(m, _LANE)
    t2 = t_flat.reshape(m, _LANE)

    # ~1 MiB per input per block (2048 rows f32 / 4096 rows bf16); 2 inputs x 2 buffers
    # = 4 MiB double-buffered, safe within every generation's scoped-VMEM budget.
    itemsize = max(o2.dtype.itemsize, t2.dtype.itemsize)
    target_rows = _BLOCK_BYTES // (_LANE * itemsize)
    tile_rows = min(target_rows, _round_up(m, _CHUNK_ROWS))
    chunk_rows = min(_CHUNK_ROWS, tile_rows)
    grid_k = _round_up(m, tile_rows) // tile_rows
    may_be_ragged = (grid_k * tile_rows != m)

    # TODO(synk): `weight` is baked in as a static Python float; a traced/array weight
    # (allowed by torch) would need to be passed as an SMEM scalar operand instead.
    kernel = functools.partial(
        _wbce_kernel, weight=float(weight), valid_rows=m, chunk_rows=chunk_rows,
        hard_labels=bool(hard_labels), may_be_ragged=may_be_ragged)

    cost = pl.CostEstimate(
        flops=10 * n,
        transcendentals=(1 if hard_labels else 2) * n,
        bytes_accessed=n * (o2.dtype.itemsize + t2.dtype.itemsize) + 8 * _LANE * 4)

    partials = pl.pallas_call(
        kernel,
        out_shape=jax.ShapeDtypeStruct((8, _LANE), jnp.float32),
        grid_spec=pltpu.PrefetchScalarGridSpec(
            num_scalar_prefetch=0,
            grid=(grid_k,),
            in_specs=[
                pl.BlockSpec((tile_rows, _LANE), lambda k: (k, 0)),
                pl.BlockSpec((tile_rows, _LANE), lambda k: (k, 0)),
            ],
            out_specs=pl.BlockSpec((8, _LANE), lambda k: (0, 0)),
        ),
        compiler_params=pltpu.CompilerParams(
            # Single reduction axis. TODO(synk): on v7x add a leading size-2
            # pltpu.CORE_PARALLEL axis so both TensorCores stream half the data.
            dimension_semantics=("arbitrary",),
            vmem_limit_bytes=32 * 1024 * 1024,
        ),
        cost_estimate=cost,
    )(o2, t2)

    # Tiny final reduce; negation hoisted here; mean divides by the true element count.
    return -jnp.sum(partials) / jnp.float32(n)


def weighted_bce_loss_ref(outputs, targets, weight=1.0):
    """Pure-JAX reference (torch semantics) for correctness checks."""
    o = jnp.reshape(outputs, targets.shape).astype(jnp.float32)
    t = targets.astype(jnp.float32)
    ce = -(t * jnp.maximum(jnp.log(o), -100.0)
           + (1.0 - t) * jnp.maximum(jnp.log(1.0 - o), -100.0))
    w = jnp.where(t == 1.0, jnp.float32(weight), jnp.float32(1.0))
    return jnp.mean(ce * w)


if __name__ == "__main__":
    ks = jax.random.split(jax.random.PRNGKey(0), 4)
    weight = 2.0  # positive-class weight

    # Case 1: classifier-style hard labels, outputs (N, 1) vs targets (N,) exercises the
    # reshape path; N = 2048 (lane-aligned -> zero-copy, single-log fast path).
    n = 2048
    outputs = jax.nn.sigmoid(jax.random.normal(ks[0], (n, 1), dtype=jnp.float32))
    targets = (jax.random.uniform(ks[1], (n,)) > 0.5).astype(jnp.float32)

    loss_fn = jax.jit(functools.partial(weighted_bce_loss, weight=weight, hard_labels=True))
    loss = jax.block_until_ready(loss_fn(outputs, targets))
    ref = jax.block_until_ready(weighted_bce_loss_ref(outputs, targets, weight))
    assert jnp.allclose(loss, ref, rtol=1e-5, atol=1e-6), (loss, ref)

    # Case 2: soft labels (some exact 1s so the weight engages) at a ragged size (777),
    # exercising the general two-log path and the in-kernel tail masking.
    n2 = 777
    o_soft = jax.nn.sigmoid(jax.random.normal(ks[2], (n2,), dtype=jnp.float32))
    t_soft = jax.random.uniform(ks[3], (n2,), dtype=jnp.float32)
    t_soft = t_soft.at[::5].set(1.0)

    loss_fn2 = jax.jit(functools.partial(weighted_bce_loss, weight=weight))
    loss2 = jax.block_until_ready(loss_fn2(o_soft, t_soft))
    ref2 = jax.block_until_ready(weighted_bce_loss_ref(o_soft, t_soft, weight))
    assert jnp.allclose(loss2, ref2, rtol=1e-5, atol=1e-6), (loss2, ref2)

    print("KERNEL_OK")
</pallas_src>

<mosaic_0001>
module attributes {stable_mosaic.version = 11 : i64} {
  func.func @_wbce_kernel(%arg0: i32, %arg1: memref<256x128xf32, #tpu.memory_space<vmem>>, %arg2: memref<256x128xf32, #tpu.memory_space<vmem>>, %arg3: memref<8x128xf32, #tpu.memory_space<vmem>>) attributes {dimension_semantics = [#tpu.dimension_semantics<arbitrary>], iteration_bounds = array<i64: 1>, scalar_prefetch = 0 : i64, scratch_operands = 0 : i64, tpu.core_type = #tpu.core_type<tc>, window_params = [{transform_indices = @transform_0, window_bounds = array<i64: 256, 128>}, {transform_indices = @transform_1, window_bounds = array<i64: 256, 128>}, {pipeline_mode = #tpu.pipeline_mode<synchronous>, transform_indices = @transform_2, window_bounds = array<i64: 8, 128>}]} {
    %c256_i32 = arith.constant 256 : i32
    %0 = arith.muli %arg0, %c256_i32 : i32
    %c0_i32 = arith.constant 0 : i32
    %1 = arith.cmpi eq, %arg0, %c0_i32 : i32
    %2 = arith.extui %1 : i1 to i32
    %c0_i32_0 = arith.constant 0 : i32
    %3 = arith.cmpi ne, %2, %c0_i32_0 : i32
    scf.if %3 {
      %cst_13 = arith.constant 0.000000e+00 : f32
      %26 = vector.broadcast %cst_13 : f32 to vector<8x128xf32>
      %c0_14 = arith.constant 0 : index
      %c0_15 = arith.constant 0 : index
      %27 = vector.load %arg3[%c0_14, %c0_15] : memref<8x128xf32, #tpu.memory_space<vmem>>, vector<8x128xf32>
      tpu.vector_store %arg3[%c0_14, %c0_15], %26 {strides = array<i32>} : memref<8x128xf32, #tpu.memory_space<vmem>>, vector<8x128xf32>,
    } else {
    }
    %c0 = arith.constant 0 : index
    %c0_1 = arith.constant 0 : index
    %4 = vector.load %arg1[%c0, %c0_1] : memref<256x128xf32, #tpu.memory_space<vmem>>, vector<256x128xf32>
    %c0_2 = arith.constant 0 : index
    %c0_3 = arith.constant 0 : index
    %5 = vector.load %arg2[%c0_2, %c0_3] : memref<256x128xf32, #tpu.memory_space<vmem>>, vector<256x128xf32>
    %cst = arith.constant 1.000000e+00 : f32
    %6 = vector.broadcast %cst : f32 to vector<256x128xf32>
    %7 = arith.cmpf oeq, %5, %6 : vector<256x128xf32>
    %cst_4 = arith.constant 2.000000e+00 : f32
    %cst_5 = arith.constant 1.000000e+00 : f32
    %8 = vector.broadcast %cst_4 : f32 to vector<256x128xf32>
    %9 = vector.broadcast %cst_5 : f32 to vector<256x128xf32>
    %10 = arith.select %7, %8, %9 : vector<256x128xi1>, vector<256x128xf32>
    %cst_6 = arith.constant 1.000000e+00 : f32
    %11 = vector.broadcast %cst_6 : f32 to vector<256x128xf32>
    %12 = arith.subf %11, %4 : vector<256x128xf32>
    %13 = arith.select %7, %4, %12 : vector<256x128xi1>, vector<256x128xf32>
    %14 = math.log %13 : vector<256x128xf32>
    %cst_7 = arith.constant -1.000000e+02 : f32
    %15 = vector.broadcast %cst_7 : f32 to vector<256x128xf32>
    %16 = arith.maximumf %14, %15 : vector<256x128xf32>
    %17 = arith.mulf %16, %10 : vector<256x128xf32>
    %c0_i32_8 = arith.constant 0 : i32
    %18 = arith.addi %0, %c0_i32_8 : i32
    %c256_i32_9 = arith.constant 256 : i32
    %19 = arith.addi %18, %c256_i32_9 : i32
    %c16_i32 = arith.constant 16 : i32
    %20 = arith.cmpi sle, %19, %c16_i32 : i32
    %21 = arith.extui %20 : i1 to i32
    %c0_i32_10 = arith.constant 0 : i32
    %22 = arith.cmpi ne, %21, %c0_i32_10 : i32
    scf.if %22 {
      %c0_13 = arith.constant 0 : index
      %c0_14 = arith.constant 0 : index
      %26 = vector.load %arg3[%c0_13, %c0_14] : memref<8x128xf32, #tpu.memory_space<vmem>>, vector<8x128xf32>
      %27 = vector.shape_cast %17 : vector<256x128xf32> to vector<32x8x128xf32>
      %cst_15 = arith.constant dense<0.000000e+00> : vector<8x128xf32>
      %28 = vector.multi_reduction <add>, %27, %cst_15 [0] : vector<32x8x128xf32> to vector<8x128xf32>
      %29 = arith.addf %26, %28 : vector<8x128xf32>
      %c0_16 = arith.constant 0 : index
      %c0_17 = arith.constant 0 : index
      %30 = vector.load %arg3[%c0_16, %c0_17] : memref<8x128xf32, #tpu.memory_space<vmem>>, vector<8x128xf32>
      tpu.vector_store %arg3[%c0_16, %c0_17], %29 {strides = array<i32>} : memref<8x128xf32, #tpu.memory_space<vmem>>, vector<8x128xf32>,
    } else {
    }
    %c16_i32_11 = arith.constant 16 : i32
    %23 = arith.cmpi sgt, %19, %c16_i32_11 : i32
    %24 = arith.extui %23 : i1 to i32
    %c0_i32_12 = arith.constant 0 : i32
    %25 = arith.cmpi ne, %24, %c0_i32_12 : i32
    scf.if %25 {
      %c0_i32_13 = arith.constant 0 : i32
      %26 = arith.addi %0, %c0_i32_13 : i32
      %27 = tpu.iota {dimensions = array<i32: 0>} : vector<256x128xi32>
      %28 = vector.broadcast %26 : i32 to vector<256x128xi32>
      %29 = arith.addi %28, %27 : vector<256x128xi32>
      %c0_14 = arith.constant 0 : index
      %c0_15 = arith.constant 0 : index
      %30 = vector.load %arg3[%c0_14, %c0_15] : memref<8x128xf32, #tpu.memory_space<vmem>>, vector<8x128xf32>
      %c16_i32_16 = arith.constant 16 : i32
      %31 = vector.broadcast %c16_i32_16 : i32 to vector<256x128xi32>
      %32 = arith.cmpi slt, %29, %31 : vector<256x128xi32>
      %cst_17 = arith.constant 0.000000e+00 : f32
      %33 = vector.broadcast %cst_17 : f32 to vector<256x128xf32>
      %34 = arith.select %32, %17, %33 : vector<256x128xi1>, vector<256x128xf32>
      %35 = vector.shape_cast %34 : vector<256x128xf32> to vector<32x8x128xf32>
      %cst_18 = arith.constant dense<0.000000e+00> : vector<8x128xf32>
      %36 = vector.multi_reduction <add>, %35, %cst_18 [0] : vector<32x8x128xf32> to vector<8x128xf32>
      %37 = arith.addf %30, %36 : vector<8x128xf32>
      %c0_19 = arith.constant 0 : index
      %c0_20 = arith.constant 0 : index
      %38 = vector.load %arg3[%c0_19, %c0_20] : memref<8x128xf32, #tpu.memory_space<vmem>>, vector<8x128xf32>
      tpu.vector_store %arg3[%c0_19, %c0_20], %37 {strides = array<i32>} : memref<8x128xf32, #tpu.memory_space<vmem>>, vector<8x128xf32>,
    } else {
    }
    return
  }
  func.func @transform_0(%arg0: i32) -> (i32, i32) {
    %c0_i32 = arith.constant 0 : i32
    %c0_i32_0 = arith.constant 0 : i32
    return %arg0, %c0_i32 : i32, i32
  }
  func.func @transform_1(%arg0: i32) -> (i32, i32) {
    %c0_i32 = arith.constant 0 : i32
    %c0_i32_0 = arith.constant 0 : i32
    return %arg0, %c0_i32 : i32, i32
  }
  func.func @transform_2(%arg0: i32) -> (i32, i32) {
    %c0_i32 = arith.constant 0 : i32
    %c0_i32_0 = arith.constant 0 : i32
    %c0_i32_1 = arith.constant 0 : i32
    return %c0_i32, %c0_i32_0 : i32, i32
  }
}

</mosaic_0001>

<llo_original>
// kernel: weighted_bce_loss.1
$region0: #{weighted_bce_loss.1}
  #allocation0 [shape = 'u32[]', space=smem, size = 0x4, offset = 0x4, fixed_abs, tag = 'smem constant byte address 0x4 - core index']
  #allocation1 [shape = 'u32[144,128]{1,0:T(1,128)}', space=vmem, size = 0x12000, scoped, tag = 'internal scratch']
  %s0 = inlined_call_operand.hbm [shape: f32[16,128], index: 0, kind: input, shape index: {}]
  %s1 = inlined_call_operand.hbm [shape: f32[16,128], index: 1, kind: input, shape index: {}]
  %s2 = inlined_call_operand.vmem [shape: f32[8,128], index: 2, kind: output, shape index: {}]
  %s3 = sld [smem:[#allocation0]]
  $region38: #{weighted_bce_loss.1} parent=0
    _
  %s5 = ssub.s32 1, %s3
  %s6 = scalar_select 0, %s5, %s3
  $region1: #{weighted_bce_loss.1} parent=0
    #allocation2 [shape = 'u8[131072]{0}', space=vmem, size = 0x20000, scoped, tag = 'input window, operand 0, single buffered']
    #allocation3 [shape = 's32[1]{0}', space=sflag, size = 0x4, scoped, tag = 'scoped memory for weighted_bce_loss.1']
    #allocation4 [shape = 'u8[131072]{0}', space=vmem, size = 0x20000, scoped, tag = 'input window, operand 1, single buffered']
    #allocation5 [shape = 's32[1]{0}', space=sflag, size = 0x4, scoped, tag = 'scoped memory for weighted_bce_loss.1']
    %7 = vsyncpa [#allocation3], 0
    %8 = vsyncpa [#allocation5], 0
    // Predicated region
    $region2: #{weighted_bce_loss.1} parent=1 // pred_check
      _
    $region3: #{weighted_bce_loss.1} parent=1 // pred_check_branch
      %10 = sbr.rel (0) target = $region5
    $region4: #{weighted_bce_loss.1} parent=1 // pred_region
      %s12 = ssub.s32 4096, 256
      %13 = vsyncadd [#allocation3], %s12
      %s14 = sshll.u32 [#allocation2], 4
      %s15 = int_to_ptr.vmem [resolvable:$true] %s14
      %20 = dma.hbm_to_vmem [thread:$0]  %s0, 256, %s15, [#allocation3], 128, 128, 8
    $region5: #{weighted_bce_loss.1} parent=1 // pred_fallthru
      _
    // Predicated region
    $region6: #{weighted_bce_loss.1} parent=1 // pred_check
      _
    $region7: #{weighted_bce_loss.1} parent=1 // pred_check_branch
      %22 = sbr.rel (0) target = $region9
    $region8: #{weighted_bce_loss.1} parent=1 // pred_region
      %s24 = ssub.s32 4096, 256
      %25 = vsyncadd [#allocation5], %s24
      %s26 = sshll.u32 [#allocation4], 4
      %s27 = int_to_ptr.vmem [resolvable:$true] %s26
      %32 = dma.hbm_to_vmem [thread:$0]  %s1, 256, %s27, [#allocation5], 128, 128, 8
    $region9: #{weighted_bce_loss.1} parent=1 // pred_fallthru
      _
    // Predicated region
    $region10: #{weighted_bce_loss.1} parent=1 // pred_check
      _
    $region11: #{weighted_bce_loss.1} parent=1 // pred_check_branch
      %34 = sbr.rel (0) target = $region13
    $region12: #{weighted_bce_loss.1} parent=1 // pred_region
      %35 = dma.done [#allocation3], 4096
    $region13: #{weighted_bce_loss.1} parent=1 // pred_fallthru
      _
    // Predicated region
    $region14: #{weighted_bce_loss.1} parent=1 // pred_check
      _
    $region15: #{weighted_bce_loss.1} parent=1 // pred_check_branch
      %37 = sbr.rel (0) target = $region17
    $region16: #{weighted_bce_loss.1} parent=1 // pred_region
      %38 = dma.done [#allocation5], 4096
    $region17: #{weighted_bce_loss.1} parent=1 // pred_fallthru
      _
    %s39 = smul.u32 0, 256
    %p40 = scmp.eq.s32.totalorder 0, 0
    // Predicated region
    $region18: #{weighted_bce_loss.1} parent=1 // pred_check
      %p41 = pneg %p40
    $region19: #{weighted_bce_loss.1} parent=1 // pred_check_branch
      %43 = sbr.rel (%p41) target = $region21
    $region20: #{weighted_bce_loss.1} parent=1 // pred_region
      %44 = vst [vmem:[%s2] sm:$0xff] 0.0
    $region21: #{weighted_bce_loss.1} parent=1 // pred_fallthru
      _
    %v45 = vld [vmem:[#allocation2] sm:$0xff]
    %v46 = vld [vmem:[#allocation2 + $0x8] sm:$0xff]
    %v47 = vld [vmem:[#allocation2 + $0x10] sm:$0xff]
    %v48 = vld [vmem:[#allocation2 + $0x18] sm:$0xff]
    %v49 = vld [vmem:[#allocation2 + $0x20] sm:$0xff]
    %v50 = vld [vmem:[#allocation2 + $0x28] sm:$0xff]
    %v51 = vld [vmem:[#allocation2 + $0x30] sm:$0xff]
    %v52 = vld [vmem:[#allocation2 + $0x38] sm:$0xff]
    %v53 = vld [vmem:[#allocation2 + $0x40] sm:$0xff]
    %v54 = vld [vmem:[#allocation2 + $0x48] sm:$0xff]
    %v55 = vld [vmem:[#allocation2 + $0x50] sm:$0xff]
    %v56 = vld [vmem:[#allocation2 + $0x58] sm:$0xff]
    %v57 = vld [vmem:[#allocation2 + $0x60] sm:$0xff]
    %v58 = vld [vmem:[#allocation2 + $0x68] sm:$0xff]
    %v59 = vld [vmem:[#allocation2 + $0x70] sm:$0xff]
    %v60 = vld [vmem:[#allocation2 + $0x78] sm:$0xff]
    %v61 = vld [vmem:[#allocation2 + $0x80] sm:$0xff]
    %v62 = vld [vmem:[#allocation2 + $0x88] sm:$0xff]
    %v63 = vld [vmem:[#allocation2 + $0x90] sm:$0xff]
    %v64 = vld [vmem:[#allocation2 + $0x98] sm:$0xff]
    %v65 = vld [vmem:[#allocation2 + $0xa0] sm:$0xff]
    %v66 = vld [vmem:[#allocation2 + $0xa8] sm:$0xff]
    %v67 = vld [vmem:[#allocation2 + $0xb0] sm:$0xff]
    %v68 = vld [vmem:[#allocation2 + $0xb8] sm:$0xff]
    %v69 = vld [vmem:[#allocation2 + $0xc0] sm:$0xff]
    %v70 = vld [vmem:[#allocation2 + $0xc8] sm:$0xff]
    %v71 = vld [vmem:[#allocation2 + $0xd0] sm:$0xff]
    %v72 = vld [vmem:[#allocation2 + $0xd8] sm:$0xff]
    %v73 = vld [vmem:[#allocation2 + $0xe0] sm:$0xff]
    %v74 = vld [vmem:[#allocation2 + $0xe8] sm:$0xff]
    %v75 = vld [vmem:[#allocation2 + $0xf0] sm:$0xff]
    %v76 = vld [vmem:[#allocation2 + $0xf8] sm:$0xff]
    %v77 = vld [vmem:[#allocation4] sm:$0xff]
    %v78 = vld [vmem:[#allocation4 + $0x8] sm:$0xff]
    %v79 = vld [vmem:[#allocation4 + $0x10] sm:$0xff]
    %v80 = vld [vmem:[#allocation4 + $0x18] sm:$0xff]
    %v81 = vld [vmem:[#allocation4 + $0x20] sm:$0xff]
    %v82 = vld [vmem:[#allocation4 + $0x28] sm:$0xff]
    %v83 = vld [vmem:[#allocation4 + $0x30] sm:$0xff]
    %v84 = vld [vmem:[#allocation4 + $0x38] sm:$0xff]
    %v85 = vld [vmem:[#allocation4 + $0x40] sm:$0xff]
    %v86 = vld [vmem:[#allocation4 + $0x48] sm:$0xff]
    %v87 = vld [vmem:[#allocation4 + $0x50] sm:$0xff]
    %v88 = vld [vmem:[#allocation4 + $0x58] sm:$0xff]
    %v89 = vld [vmem:[#allocation4 + $0x60] sm:$0xff]
    %v90 = vld [vmem:[#allocation4 + $0x68] sm:$0xff]
    %v91 = vld [vmem:[#allocation4 + $0x70] sm:$0xff]
    %v92 = vld [vmem:[#allocation4 + $0x78] sm:$0xff]
    %v93 = vld [vmem:[#allocation4 + $0x80] sm:$0xff]
    %v94 = vld [vmem:[#allocation4 + $0x88] sm:$0xff]
    %v95 = vld [vmem:[#allocation4 + $0x90] sm:$0xff]
    %v96 = vld [vmem:[#allocation4 + $0x98] sm:$0xff]
    %v97 = vld [vmem:[#allocation4 + $0xa0] sm:$0xff]
    %v98 = vld [vmem:[#allocation4 + $0xa8] sm:$0xff]
    %v99 = vld [vmem:[#allocation4 + $0xb0] sm:$0xff]
    %v100 = vld [vmem:[#allocation4 + $0xb8] sm:$0xff]
    %v101 = vld [vmem:[#allocation4 + $0xc0] sm:$0xff]
    %v102 = vld [vmem:[#allocation4 + $0xc8] sm:$0xff]
    %v103 = vld [vmem:[#allocation4 + $0xd0] sm:$0xff]
    %v104 = vld [vmem:[#allocation4 + $0xd8] sm:$0xff]
    %v105 = vld [vmem:[#allocation4 + $0xe0] sm:$0xff]
    %v106 = vld [vmem:[#allocation4 + $0xe8] sm:$0xff]
    %v107 = vld [vmem:[#allocation4 + $0xf0] sm:$0xff]
    %v108 = vld [vmem:[#allocation4 + $0xf8] sm:$0xff]
    %vm109 = vcmp.eq.f32.partialorder %v77, 1.0
    %vm110 = vcmp.eq.f32.partialorder %v78, 1.0
    %vm111 = vcmp.eq.f32.partialorder %v79, 1.0
    %vm112 = vcmp.eq.f32.partialorder %v80, 1.0
    %vm113 = vcmp.eq.f32.partialorder %v81, 1.0
    %vm114 = vcmp.eq.f32.partialorder %v82, 1.0
    %vm115 = vcmp.eq.f32.partialorder %v83, 1.0
    %vm116 = vcmp.eq.f32.partialorder %v84, 1.0
    %vm117 = vcmp.eq.f32.partialorder %v85, 1.0
    %vm118 = vcmp.eq.f32.partialorder %v86, 1.0
    %vm119 = vcmp.eq.f32.partialorder %v87, 1.0
    %vm120 = vcmp.eq.f32.partialorder %v88, 1.0
    %vm121 = vcmp.eq.f32.partialorder %v89, 1.0
    %vm122 = vcmp.eq.f32.partialorder %v90, 1.0
    %vm123 = vcmp.eq.f32.partialorder %v91, 1.0
    %vm124 = vcmp.eq.f32.partialorder %v92, 1.0
    %vm125 = vcmp.eq.f32.partialorder %v93, 1.0
    %vm126 = vcmp.eq.f32.partialorder %v94, 1.0
    %vm127 = vcmp.eq.f32.partialorder %v95, 1.0
    %vm128 = vcmp.eq.f32.partialorder %v96, 1.0
    %vm129 = vcmp.eq.f32.partialorder %v97, 1.0
    %vm130 = vcmp.eq.f32.partialorder %v98, 1.0
    %vm131 = vcmp.eq.f32.partialorder %v99, 1.0
    %vm132 = vcmp.eq.f32.partialorder %v100, 1.0
    %vm133 = vcmp.eq.f32.partialorder %v101, 1.0
    %vm134 = vcmp.eq.f32.partialorder %v102, 1.0
    %vm135 = vcmp.eq.f32.partialorder %v103, 1.0
    %vm136 = vcmp.eq.f32.partialorder %v104, 1.0
    %vm137 = vcmp.eq.f32.partialorder %v105, 1.0
    %vm138 = vcmp.eq.f32.partialorder %v106, 1.0
    %vm139 = vcmp.eq.f32.partialorder %v107, 1.0
    %vm140 = vcmp.eq.f32.partialorder %v108, 1.0
    %v141 = vsel %vm109, 2.0, 1.0
    %v142 = vsel %vm110, 2.0, 1.0
    %v143 = vsel %vm111, 2.0, 1.0
    %v144 = vsel %vm112, 2.0, 1.0
    %v145 = vsel %vm113, 2.0, 1.0
    %v146 = vsel %vm114, 2.0, 1.0
    %v147 = vsel %vm115, 2.0, 1.0
    %v148 = vsel %vm116, 2.0, 1.0
    %v149 = vsel %vm117, 2.0, 1.0
    %v150 = vsel %vm118, 2.0, 1.0
    %v151 = vsel %vm119, 2.0, 1.0
    %v152 = vsel %vm120, 2.0, 1.0
    %v153 = vsel %vm121, 2.0, 1.0
    %v154 = vsel %vm122, 2.0, 1.0
    %v155 = vsel %vm123, 2.0, 1.0
    %v156 = vsel %vm124, 2.0, 1.0
    %v157 = vsel %vm125, 2.0, 1.0
    %v158 = vsel %vm126, 2.0, 1.0
    %v159 = vsel %vm127, 2.0, 1.0
    %v160 = vsel %vm128, 2.0, 1.0
    %v161 = vsel %vm129, 2.0, 1.0
    %v162 = vsel %vm130, 2.0, 1.0
    %v163 = vsel %vm131, 2.0, 1.0
    %v164 = vsel %vm132, 2.0, 1.0
    %v165 = vsel %vm133, 2.0, 1.0
    %v166 = vsel %vm134, 2.0, 1.0
    %v167 = vsel %vm135, 2.0, 1.0
    %v168 = vsel %vm136, 2.0, 1.0
    %v169 = vsel %vm137, 2.0, 1.0
    %v170 = vsel %vm138, 2.0, 1.0
    %v171 = vsel %vm139, 2.0, 1.0
    %v172 = vsel %vm140, 2.0, 1.0
    %v173 = vsub.f32 1.0, %v45
    %v174 = vsub.f32 1.0, %v46
    %v175 = vsub.f32 1.0, %v47
    %v176 = vsub.f32 1.0, %v48
    %v177 = vsub.f32 1.0, %v49
    %v178 = vsub.f32 1.0, %v50
    %v179 = vsub.f32 1.0, %v51
    %v180 = vsub.f32 1.0, %v52
    %v181 = vsub.f32 1.0, %v53
    %v182 = vsub.f32 1.0, %v54
    %v183 = vsub.f32 1.0, %v55
    %v184 = vsub.f32 1.0, %v56
    %v185 = vsub.f32 1.0, %v57
    %v186 = vsub.f32 1.0, %v58
    %v187 = vsub.f32 1.0, %v59
    %v188 = vsub.f32 1.0, %v60
    %v189 = vsub.f32 1.0, %v61
    %v190 = vsub.f32 1.0, %v62
    %v191 = vsub.f32 1.0, %v63
    %v192 = vsub.f32 1.0, %v64
    %v193 = vsub.f32 1.0, %v65
    %v194 = vsub.f32 1.0, %v66
    %v195 = vsub.f32 1.0, %v67
    %v196 = vsub.f32 1.0, %v68
    %v197 = vsub.f32 1.0, %v69
    %v198 = vsub.f32 1.0, %v70
    %v199 = vsub.f32 1.0, %v71
    %v200 = vsub.f32 1.0, %v72
    %v201 = vsub.f32 1.0, %v73
    %v202 = vsub.f32 1.0, %v74
    %v203 = vsub.f32 1.0, %v75
    %v204 = vsub.f32 1.0, %v76
    %v205 = vsel %vm109, %v45, %v173
    %v206 = vsel %vm110, %v46, %v174
    %v207 = vsel %vm111, %v47, %v175
    %v208 = vsel %vm112, %v48, %v176
    %v209 = vsel %vm113, %v49, %v177
    %v210 = vsel %vm114, %v50, %v178
    %v211 = vsel %vm115, %v51, %v179
    %v212 = vsel %vm116, %v52, %v180
    %v213 = vsel %vm117, %v53, %v181
    %v214 = vsel %vm118, %v54, %v182
    %v215 = vsel %vm119, %v55, %v183
    %v216 = vsel %vm120, %v56, %v184
    %v217 = vsel %vm121, %v57, %v185
    %v218 = vsel %vm122, %v58, %v186
    %v219 = vsel %vm123, %v59, %v187
    %v220 = vsel %vm124, %v60, %v188
    %v221 = vsel %vm125, %v61, %v189
    %v222 = vsel %vm126, %v62, %v190
    %v223 = vsel %vm127, %v63, %v191
    %v224 = vsel %vm128, %v64, %v192
    %v225 = vsel %vm129, %v65, %v193
    %v226 = vsel %vm130, %v66, %v194
    %v227 = vsel %vm131, %v67, %v195
    %v228 = vsel %vm132, %v68, %v196
    %v229 = vsel %vm133, %v69, %v197
    %v230 = vsel %vm134, %v70, %v198
    %v231 = vsel %vm135, %v71, %v199
    %v232 = vsel %vm136, %v72, %v200
    %v233 = vsel %vm137, %v73, %v201
    %v234 = vsel %vm138, %v74, %v202
    %v235 = vsel %vm139, %v75, %v203
    %v236 = vsel %vm140, %v76, %v204
    %v237 = vlog2.pop %v205
    %v238 = vmul.f32 %v237, 0.6931472
    %v239 = vlog2.pop %v206
    %v240 = vmul.f32 %v239, 0.6931472
    %v241 = vlog2.pop %v207
    %v242 = vmul.f32 %v241, 0.6931472
    %v243 = vlog2.pop %v208
    %v244 = vmul.f32 %v243, 0.6931472
    %v245 = vlog2.pop %v209
    %v246 = vmul.f32 %v245, 0.6931472
    %v247 = vlog2.pop %v210
    %v248 = vmul.f32 %v247, 0.6931472
    %v249 = vlog2.pop %v211
    %v250 = vmul.f32 %v249, 0.6931472
    %v251 = vlog2.pop %v212
    %v252 = vmul.f32 %v251, 0.6931472
    %v253 = vlog2.pop %v213
    %v254 = vmul.f32 %v253, 0.6931472
    %v255 = vlog2.pop %v214
    %v256 = vmul.f32 %v255, 0.6931472
    %v257 = vlog2.pop %v215
    %v258 = vmul.f32 %v257, 0.6931472
    %v259 = vlog2.pop %v216
    %v260 = vmul.f32 %v259, 0.6931472
    %v261 = vlog2.pop %v217
    %v262 = vmul.f32 %v261, 0.6931472
    %v263 = vlog2.pop %v218
    %v264 = vmul.f32 %v263, 0.6931472
    %v265 = vlog2.pop %v219
    %v266 = vmul.f32 %v265, 0.6931472
    %v267 = vlog2.pop %v220
    %v268 = vmul.f32 %v267, 0.6931472
    %v269 = vlog2.pop %v221
    %v270 = vmul.f32 %v269, 0.6931472
    %v271 = vlog2.pop %v222
    %v272 = vmul.f32 %v271, 0.6931472
    %v273 = vlog2.pop %v223
    %v274 = vmul.f32 %v273, 0.6931472
    %v275 = vlog2.pop %v224
    %v276 = vmul.f32 %v275, 0.6931472
    %v277 = vlog2.pop %v225
    %v278 = vmul.f32 %v277, 0.6931472
    %v279 = vlog2.pop %v226
    %v280 = vmul.f32 %v279, 0.6931472
    %v281 = vlog2.pop %v227
    %v282 = vmul.f32 %v281, 0.6931472
    %v283 = vlog2.pop %v228
    %v284 = vmul.f32 %v283, 0.6931472
    %v285 = vlog2.pop %v229
    %v286 = vmul.f32 %v285, 0.6931472
    %v287 = vlog2.pop %v230
    %v288 = vmul.f32 %v287, 0.6931472
    %v289 = vlog2.pop %v231
    %v290 = vmul.f32 %v289, 0.6931472
    %v291 = vlog2.pop %v232
    %v292 = vmul.f32 %v291, 0.6931472
    %v293 = vlog2.pop %v233
    %v294 = vmul.f32 %v293, 0.6931472
    %v295 = vlog2.pop %v234
    %v296 = vmul.f32 %v295, 0.6931472
    %v297 = vlog2.pop %v235
    %v298 = vmul.f32 %v297, 0.6931472
    %v299 = vlog2.pop %v236
    %v300 = vmul.f32 %v299, 0.6931472
    %v301 = vmax.f32 %v238, -100.0
    %v302 = vmax.f32 %v240, -100.0
    %v303 = vmax.f32 %v242, -100.0
    %v304 = vmax.f32 %v244, -100.0
    %v305 = vmax.f32 %v246, -100.0
    %v306 = vmax.f32 %v248, -100.0
    %v307 = vmax.f32 %v250, -100.0
    %v308 = vmax.f32 %v252, -100.0
    %v309 = vmax.f32 %v254, -100.0
    %v310 = vmax.f32 %v256, -100.0
    %v311 = vmax.f32 %v258, -100.0
    %v312 = vmax.f32 %v260, -100.0
    %v313 = vmax.f32 %v262, -100.0
    %v314 = vmax.f32 %v264, -100.0
    %v315 = vmax.f32 %v266, -100.0
    %v316 = vmax.f32 %v268, -100.0
    %v317 = vmax.f32 %v270, -100.0
    %v318 = vmax.f32 %v272, -100.0
    %v319 = vmax.f32 %v274, -100.0
    %v320 = vmax.f32 %v276, -100.0
    %v321 = vmax.f32 %v278, -100.0
    %v322 = vmax.f32 %v280, -100.0
    %v323 = vmax.f32 %v282, -100.0
    %v324 = vmax.f32 %v284, -100.0
    %v325 = vmax.f32 %v286, -100.0
    %v326 = vmax.f32 %v288, -100.0
    %v327 = vmax.f32 %v290, -100.0
    %v328 = vmax.f32 %v292, -100.0
    %v329 = vmax.f32 %v294, -100.0
    %v330 = vmax.f32 %v296, -100.0
    %v331 = vmax.f32 %v298, -100.0
    %v332 = vmax.f32 %v300, -100.0
    %v333 = vmul.f32 %v301, %v141
    %v334 = vmul.f32 %v302, %v142
    %v335 = vmul.f32 %v303, %v143
    %v336 = vmul.f32 %v304, %v144
    %v337 = vmul.f32 %v305, %v145
    %v338 = vmul.f32 %v306, %v146
    %v339 = vmul.f32 %v307, %v147
    %v340 = vmul.f32 %v308, %v148
    %v341 = vmul.f32 %v309, %v149
    %v342 = vmul.f32 %v310, %v150
    %v343 = vmul.f32 %v311, %v151
    %v344 = vmul.f32 %v312, %v152
    %v345 = vmul.f32 %v313, %v153
    %v346 = vmul.f32 %v314, %v154
    %v347 = vmul.f32 %v315, %v155
    %v348 = vmul.f32 %v316, %v156
    %v349 = vmul.f32 %v317, %v157
    %v350 = vmul.f32 %v318, %v158
    %v351 = vmul.f32 %v319, %v159
    %v352 = vmul.f32 %v320, %v160
    %v353 = vmul.f32 %v321, %v161
    %v354 = vmul.f32 %v322, %v162
    %v355 = vmul.f32 %v323, %v163
    %v356 = vmul.f32 %v324, %v164
    %v357 = vmul.f32 %v325, %v165
    %v358 = vmul.f32 %v326, %v166
    %v359 = vmul.f32 %v327, %v167
    %v360 = vmul.f32 %v328, %v168
    %v361 = vmul.f32 %v329, %v169
    %v362 = vmul.f32 %v330, %v170
    %v363 = vmul.f32 %v331, %v171
    %v364 = vmul.f32 %v332, %v172
    %s365 = sadd.s32 %s39, 256
    %p366 = scmp.le.s32.totalorder %s365, 16
    // Predicated region
    $region22: #{weighted_bce_loss.1} parent=1 // pred_check
      %p367 = pneg %p366
    $region23: #{weighted_bce_loss.1} parent=1 // pred_check_branch
      %369 = sbr.rel (%p367) target = $region25
    $region24: #{weighted_bce_loss.1} parent=1 // pred_region
      %v370 = vld [vmem:[%s2] sm:$0xff]
      %v371 = vadd.f32 %v333, %v334
      %v372 = vadd.f32 %v371, %v335
      %v373 = vadd.f32 %v372, %v336
      %v374 = vadd.f32 %v373, %v337
      %v375 = vadd.f32 %v374, %v338
      %v376 = vadd.f32 %v375, %v339
      %v377 = vadd.f32 %v376, %v340
      %v378 = vadd.f32 %v377, %v341
      %v379 = vadd.f32 %v378, %v342
      %v380 = vadd.f32 %v379, %v343
      %v381 = vadd.f32 %v380, %v344
      %v382 = vadd.f32 %v381, %v345
      %v383 = vadd.f32 %v382, %v346
      %v384 = vadd.f32 %v383, %v347
      %v385 = vadd.f32 %v384, %v348
      %v386 = vadd.f32 %v385, %v349
      %v387 = vadd.f32 %v386, %v350
      %v388 = vadd.f32 %v387, %v351
      %v389 = vadd.f32 %v388, %v352
      %v390 = vadd.f32 %v389, %v353
      %v391 = vadd.f32 %v390, %v354
      %v392 = vadd.f32 %v391, %v355
      %v393 = vadd.f32 %v392, %v356
      %v394 = vadd.f32 %v393, %v357
      %v395 = vadd.f32 %v394, %v358
      %v396 = vadd.f32 %v395, %v359
      %v397 = vadd.f32 %v396, %v360
      %v398 = vadd.f32 %v397, %v361
      %v399 = vadd.f32 %v398, %v362
      %v400 = vadd.f32 %v399, %v363
      %v401 = vadd.f32 %v400, %v364
      %v402 = vadd.f32 %v370, %v401
      %403 = vst [vmem:[%s2] sm:$0xff] %v402
    $region25: #{weighted_bce_loss.1} parent=1 // pred_fallthru
      _
    %p404 = scmp.gt.s32.totalorder %s365, 16
    // Predicated region
    $region26: #{weighted_bce_loss.1} parent=1 // pred_check
      %p405 = pneg %p404
    $region27: #{weighted_bce_loss.1} parent=1 // pred_check_branch
      %407 = sbr.rel (%p405) target = $region29
    $region28: #{weighted_bce_loss.1} parent=1 // pred_region
      %v408 = vlaneseq
      %v409 = vshrl.u32 %v408, 7
      %v410 = vadd.s32 %v409, 8
      %v411 = vadd.s32 %v409, 16
      %v412 = vadd.s32 %v409, 24
      %v413 = vadd.s32 %v409, 32
      %v414 = vadd.s32 %v409, 40
      %v415 = vadd.s32 %v409, 48
      %v416 = vadd.s32 %v409, 56
      %v417 = vadd.s32 %v409, 64
      %v418 = vadd.s32 %v409, 72
      %v419 = vadd.s32 %v409, 80
      %v420 = vadd.s32 %v409, 88
      %v421 = vadd.s32 %v409, 96
      %v422 = vadd.s32 %v409, 104
      %v423 = vadd.s32 %v409, 112
      %v424 = vadd.s32 %v409, 120
      %v425 = vadd.s32 %v409, 128
      %v426 = vadd.s32 %v409, 136
      %v427 = vadd.s32 %v409, 144
      %v428 = vadd.s32 %v409, 152
      %v429 = vadd.s32 %v409, 160
      %v430 = vadd.s32 %v409, 168
      %v431 = vadd.s32 %v409, 176
      %v432 = vadd.s32 %v409, 184
      %v433 = vadd.s32 %v409, 192
      %v434 = vadd.s32 %v409, 200
      %v435 = vadd.s32 %v409, 208
      %v436 = vadd.s32 %v409, 216
      %v437 = vadd.s32 %v409, 224
      %v438 = vadd.s32 %v409, 232
      %v439 = vadd.s32 %v409, 240
      %v440 = vadd.s32 %v409, 248
      %v441 = vstv %s39
      %v442 = vadd.s32 %v441, %v409
      %v443 = vadd.s32 %v441, %v410
      %v444 = vadd.s32 %v441, %v411
      %v445 = vadd.s32 %v441, %v412
      %v446 = vadd.s32 %v441, %v413
      %v447 = vadd.s32 %v441, %v414
      %v448 = vadd.s32 %v441, %v415
      %v449 = vadd.s32 %v441, %v416
      %v450 = vadd.s32 %v441, %v417
      %v451 = vadd.s32 %v441, %v418
      %v452 = vadd.s32 %v441, %v419
      %v453 = vadd.s32 %v441, %v420
      %v454 = vadd.s32 %v441, %v421
      %v455 = vadd.s32 %v441, %v422
      %v456 = vadd.s32 %v441, %v423
      %v457 = vadd.s32 %v441, %v424
      %v458 = vadd.s32 %v441, %v425
      %v459 = vadd.s32 %v441, %v426
      %v460 = vadd.s32 %v441, %v427
      %v461 = vadd.s32 %v441, %v428
      %v462 = vadd.s32 %v441, %v429
      %v463 = vadd.s32 %v441, %v430
      %v464 = vadd.s32 %v441, %v431
      %v465 = vadd.s32 %v441, %v432
      %v466 = vadd.s32 %v441, %v433
      %v467 = vadd.s32 %v441, %v434
      %v468 = vadd.s32 %v441, %v435
      %v469 = vadd.s32 %v441, %v436
      %v470 = vadd.s32 %v441, %v437
      %v471 = vadd.s32 %v441, %v438
      %v472 = vadd.s32 %v441, %v439
      %v473 = vadd.s32 %v441, %v440
      %v474 = vld [vmem:[%s2] sm:$0xff]
      %vm475 = vcmp.lt.s32.totalorder %v442, 16
      %vm476 = vcmp.lt.s32.totalorder %v443, 16
      %vm477 = vcmp.lt.s32.totalorder %v444, 16
      %vm478 = vcmp.lt.s32.totalorder %v445, 16
      %vm479 = vcmp.lt.s32.totalorder %v446, 16
      %vm480 = vcmp.lt.s32.totalorder %v447, 16
      %vm481 = vcmp.lt.s32.totalorder %v448, 16
      %vm482 = vcmp.lt.s32.totalorder %v449, 16
      %vm483 = vcmp.lt.s32.totalorder %v450, 16
      %vm484 = vcmp.lt.s32.totalorder %v451, 16
      %vm485 = vcmp.lt.s32.totalorder %v452, 16
      %vm486 = vcmp.lt.s32.totalorder %v453, 16
      %vm487 = vcmp.lt.s32.totalorder %v454, 16
      %vm488 = vcmp.lt.s32.totalorder %v455, 16
      %vm489 = vcmp.lt.s32.totalorder %v456, 16
      %vm490 = vcmp.lt.s32.totalorder %v457, 16
      %vm491 = vcmp.lt.s32.totalorder %v458, 16
      %vm492 = vcmp.lt.s32.totalorder %v459, 16
      %vm493 = vcmp.lt.s32.totalorder %v460, 16
      %vm494 = vcmp.lt.s32.totalorder %v461, 16
      %vm495 = vcmp.lt.s32.totalorder %v462, 16
      %vm496 = vcmp.lt.s32.totalorder %v463, 16
      %vm497 = vcmp.lt.s32.totalorder %v464, 16
      %vm498 = vcmp.lt.s32.totalorder %v465, 16
      %vm499 = vcmp.lt.s32.totalorder %v466, 16
      %vm500 = vcmp.lt.s32.totalorder %v467, 16
      %vm501 = vcmp.lt.s32.totalorder %v468, 16
      %vm502 = vcmp.lt.s32.totalorder %v469, 16
      %vm503 = vcmp.lt.s32.totalorder %v470, 16
      %vm504 = vcmp.lt.s32.totalorder %v471, 16
      %vm505 = vcmp.lt.s32.totalorder %v472, 16
      %vm506 = vcmp.lt.s32.totalorder %v473, 16
      %v507 = vsel %vm475, %v333, 0.0
      %v508 = vsel %vm476, %v334, 0.0
      %v509 = vsel %vm477, %v335, 0.0
      %v510 = vsel %vm478, %v336, 0.0
      %v511 = vsel %vm479, %v337, 0.0
      %v512 = vsel %vm480, %v338, 0.0
      %v513 = vsel %vm481, %v339, 0.0
      %v514 = vsel %vm482, %v340, 0.0
      %v515 = vsel %vm483, %v341, 0.0
      %v516 = vsel %vm484, %v342, 0.0
      %v517 = vsel %vm485, %v343, 0.0
      %v518 = vsel %vm486, %v344, 0.0
      %v519 = vsel %vm487, %v345, 0.0
      %v520 = vsel %vm488, %v346, 0.0
      %v521 = vsel %vm489, %v347, 0.0
      %v522 = vsel %vm490, %v348, 0.0
      %v523 = vsel %vm491, %v349, 0.0
      %v524 = vsel %vm492, %v350, 0.0
      %v525 = vsel %vm493, %v351, 0.0
      %v526 = vsel %vm494, %v352, 0.0
      %v527 = vsel %vm495, %v353, 0.0
      %v528 = vsel %vm496, %v354, 0.0
      %v529 = vsel %vm497, %v355, 0.0
      %v530 = vsel %vm498, %v356, 0.0
      %v531 = vsel %vm499, %v357, 0.0
      %v532 = vsel %vm500, %v358, 0.0
      %v533 = vsel %vm501, %v359, 0.0
      %v534 = vsel %vm502, %v360, 0.0
      %v535 = vsel %vm503, %v361, 0.0
      %v536 = vsel %vm504, %v362, 0.0
      %v537 = vsel %vm505, %v363, 0.0
      %v538 = vsel %vm506, %v364, 0.0
      %v539 = vadd.f32 %v507, %v508
      %v540 = vadd.f32 %v539, %v509
      %v541 = vadd.f32 %v540, %v510
      %v542 = vadd.f32 %v541, %v511
      %v543 = vadd.f32 %v542, %v512
      %v544 = vadd.f32 %v543, %v513
      %v545 = vadd.f32 %v544, %v514
      %v546 = vadd.f32 %v545, %v515
      %v547 = vadd.f32 %v546, %v516
      %v548 = vadd.f32 %v547, %v517
      %v549 = vadd.f32 %v548, %v518
      %v550 = vadd.f32 %v549, %v519
      %v551 = vadd.f32 %v550, %v520
      %v552 = vadd.f32 %v551, %v521
      %v553 = vadd.f32 %v552, %v522
      %v554 = vadd.f32 %v553, %v523
      %v555 = vadd.f32 %v554, %v524
      %v556 = vadd.f32 %v555, %v525
      %v557 = vadd.f32 %v556, %v526
      %v558 = vadd.f32 %v557, %v527
      %v559 = vadd.f32 %v558, %v528
      %v560 = vadd.f32 %v559, %v529
      %v561 = vadd.f32 %v560, %v530
      %v562 = vadd.f32 %v561, %v531
      %v563 = vadd.f32 %v562, %v532
      %v564 = vadd.f32 %v563, %v533
      %v565 = vadd.f32 %v564, %v534
      %v566 = vadd.f32 %v565, %v535
      %v567 = vadd.f32 %v566, %v536
      %v568 = vadd.f32 %v567, %v537
      %v569 = vadd.f32 %v568, %v538
      %v570 = vadd.f32 %v474, %v569
      %571 = vst [vmem:[%s2] sm:$0xff] %v570
    $region29: #{weighted_bce_loss.1} parent=1 // pred_fallthru
      _
    // Predicated region
    $region30: #{weighted_bce_loss.1} parent=1 // pred_check
      _
    $region31: #{weighted_bce_loss.1} parent=1 // pred_check_branch
      %573 = sbr.rel (0) target = $region33
    $region32: #{weighted_bce_loss.1} parent=1 // pred_region
      _
    $region33: #{weighted_bce_loss.1} parent=1 // pred_fallthru
      _
    // Predicated region
    $region34: #{weighted_bce_loss.1} parent=1 // pred_check
      _
    $region35: #{weighted_bce_loss.1} parent=1 // pred_check_branch
      %575 = sbr.rel (0) target = $region37
    $region36: #{weighted_bce_loss.1} parent=1 // pred_region
      _
    $region37: #{weighted_bce_loss.1} parent=1 // pred_fallthru
      _
    %576 = vsyncpa [#allocation3], 1
    %577 = vsyncpa [#allocation5], 1

</llo_original>
